<compile_context>
chip_gen: v7x
topology: tpu7x:2x2x1
jax: 0.10.0
libtpu: 0.0.40
codegen_flags: <defaults>
</compile_context>

<pallas_src>
import jax
import jax.numpy as jnp
from jax.experimental import pallas as pl
from jax.experimental.pallas import tpu as pltpu

_LANE = 128
_SUBLANE = 8
_TILE_BYTES = 4 * 1024 * 1024   # per-input, per-pipeline-buffer VMEM budget


def _lane_dense(x):
    """Flatten to a (rows, 128) slab. Pads only to a multiple of 8*128 elements
    (a no-op for typical mask sizes); tile-level raggedness is handled in-kernel."""
    flat = x.reshape(-1)
    total = flat.shape[0]
    granule = _SUBLANE * _LANE                      # 1024 elements
    padded = -(-total // granule) * granule
    if padded != total:
        # Small layout pad (<= 1023 elems of zeros); only copies when needed.
        flat = jnp.pad(flat, (0, padded - total))
    rows = padded // _LANE
    return flat.reshape(rows, _LANE), rows


def saliency_aware_loss(actual_lbl, predicted_lbl, salient_area,
                        ground_truth_mask, weight_loss):
    """JAX/Pallas equivalent of SaliencyAwareLoss.forward -> (loss, ce, iou)."""
    labels = actual_lbl.astype(jnp.int32).reshape(-1, 1)           # (N, 1)
    logits = predicted_lbl                                          # native dtype
    n, c = logits.shape

    # Native-dtype, lane-dense mask slabs (no f32 upcast in the wrapper).
    sal2d, rows = _lane_dense(salient_area)
    msk2d, rows_m = _lane_dense(ground_truth_mask)
    assert rows == rows_m, "salient_area and ground_truth_mask must match in size"

    # dtype-scaled row tile: 4 MiB per input per buffer (f32:8192, bf16:16384, int8:32768).
    itemsize = max(jnp.dtype(sal2d.dtype).itemsize, jnp.dtype(msk2d.dtype).itemsize)
    max_rows = (_TILE_BYTES // (_LANE * itemsize)) // 32 * 32       # multiple of 32
    tile_rows = rows if rows <= max_rows else max_rows              # rows is a multiple of 8
    num_tiles = pl.cdiv(rows, tile_rows)
    ragged = (rows % tile_rows) != 0                                # static

    w = jnp.asarray(weight_loss, jnp.float32).reshape(1, 1)

    def kernel(w_ref, logits_ref, labels_ref, sal_ref, msk_ref,
               loss_ref, ce_ref, iou_ref, acc_int_ref, acc_sal_ref, ce_sc):
        step = pl.program_id(0)

        # ---- step 0: zero vector accumulators, compute cross-entropy once ----
        @pl.when(step == 0)
        def _():
            acc_int_ref[...] = jnp.zeros_like(acc_int_ref)
            acc_sal_ref[...] = jnp.zeros_like(acc_sal_ref)

            lg = logits_ref[...].astype(jnp.float32)                # (N, C)
            lb = labels_ref[...]                                     # (N, 1) int32
            col = jax.lax.broadcasted_iota(jnp.int32, (n, c), 1)
            picked = jnp.sum(jnp.where(col == lb, lg, jnp.float32(0.0)),
                             axis=-1, keepdims=True)                 # (N, 1)
            rmax = jnp.max(lg, axis=-1, keepdims=True)
            lse = rmax + jnp.log(jnp.sum(jnp.exp(lg - rmax),
                                         axis=-1, keepdims=True))
            ce_sc[0] = jnp.sum(lse - picked) / jnp.float32(n)

        # ---- every step: VPU-only partial reduction into (8,128) accumulators ----
        sal = sal_ref[...].astype(jnp.float32)                       # (tile_rows, 128)
        msk = msk_ref[...].astype(jnp.float32)
        if ragged:  # mask the garbage region of the (possibly) partial last tile
            gid = (jax.lax.broadcasted_iota(jnp.int32, (tile_rows, _LANE), 0)
                   + step * tile_rows)
            valid = gid < rows
            sal = jnp.where(valid, sal, jnp.float32(0.0))
            msk = jnp.where(valid, msk, jnp.float32(0.0))
        prod = sal * msk
        r = tile_rows // _SUBLANE
        acc_int_ref[...] += prod.reshape(r, _SUBLANE, _LANE).sum(axis=0)
        acc_sal_ref[...] += sal.reshape(r, _SUBLANE, _LANE).sum(axis=0)

        # ---- last step: single XLU reduce to scalars, finalize loss ----
        @pl.when(step == pl.num_programs(0) - 1)
        def _():
            inter = jnp.sum(acc_int_ref[...])
            area = jnp.sum(acc_sal_ref[...])
            iou = inter / (area + jnp.float32(1e-6))
            ce = ce_sc[0]
            wv = w_ref[0, 0]
            ce_ref[0, 0] = ce
            iou_ref[0, 0] = iou
            loss_ref[0, 0] = wv * ce - (jnp.float32(1.0) - wv) * iou

    mask_bytes = (sal2d.size * jnp.dtype(sal2d.dtype).itemsize
                  + msk2d.size * jnp.dtype(msk2d.dtype).itemsize)
    cost = pl.CostEstimate(
        flops=3 * rows * _LANE + 6 * n * c,
        transcendentals=n * c + n,
        bytes_accessed=mask_bytes + logits.size * jnp.dtype(logits.dtype).itemsize
                       + labels.size * 4 + 12)

    scalar_out = jax.ShapeDtypeStruct((1, 1), jnp.float32)
    loss, ce, iou = pl.pallas_call(
        kernel,
        grid=(num_tiles,),
        out_shape=(scalar_out, scalar_out, scalar_out),
        in_specs=[
            pl.BlockSpec(memory_space=pltpu.MemorySpace.SMEM),     # weight (1,1)
            pl.BlockSpec(memory_space=pltpu.MemorySpace.VMEM),     # logits (N,C) resident
            pl.BlockSpec(memory_space=pltpu.MemorySpace.VMEM),     # labels (N,1) resident
            pl.BlockSpec((tile_rows, _LANE), lambda i: (i, 0)),    # salient tile (pipelined)
            pl.BlockSpec((tile_rows, _LANE), lambda i: (i, 0)),    # mask tile    (pipelined)
        ],
        out_specs=(
            pl.BlockSpec(memory_space=pltpu.MemorySpace.SMEM),     # loss
            pl.BlockSpec(memory_space=pltpu.MemorySpace.SMEM),     # ce
            pl.BlockSpec(memory_space=pltpu.MemorySpace.SMEM),     # iou
        ),
        scratch_shapes=[
            pltpu.VMEM((_SUBLANE, _LANE), jnp.float32),            # intersection acc
            pltpu.VMEM((_SUBLANE, _LANE), jnp.float32),            # salient-area acc
            pltpu.SMEM((1,), jnp.float32),                         # cross-entropy scratch
        ],
        compiler_params=pltpu.CompilerParams(
            dimension_semantics=("arbitrary",),                    # reduction axis
            vmem_limit_bytes=32 * 1024 * 1024,                     # larger tiles fit v5e too
        ),
        cost_estimate=cost,
    )(w, logits, labels, sal2d, msk2d)
    return loss[0, 0], ce[0, 0], iou[0, 0]


def _reference(actual_lbl, predicted_lbl, salient_area, ground_truth_mask, w):
    logits = predicted_lbl.astype(jnp.float32)
    lse = jax.scipy.special.logsumexp(logits, axis=-1)
    picked = jnp.take_along_axis(logits, actual_lbl[:, None].astype(jnp.int32),
                                 axis=-1)[:, 0]
    ce = jnp.mean(lse - picked)
    inter = jnp.sum(salient_area.astype(jnp.float32) *
                    ground_truth_mask.astype(jnp.float32))
    area = jnp.sum(salient_area.astype(jnp.float32))
    iou = inter / (area + 1e-6)
    return w * ce - (1.0 - w) * iou, ce, iou


if __name__ == "__main__":
    key = jax.random.PRNGKey(0)
    k1, k2, k3, k4 = jax.random.split(key, 4)

    N, C = 8, 4                 # classification batch / num classes
    B, H, W = 2, 16, 16         # mask batch / spatial
    weight_loss = 0.7

    predicted_lbl = jax.random.normal(k1, (N, C), dtype=jnp.float32)
    actual_lbl = jax.random.randint(k2, (N,), 0, C, dtype=jnp.int32)
    # Narrow native dtype for masks (int8); the kernel casts after load.
    salient_area = (jax.random.uniform(k3, (B, 1, H, W)) > 0.5).astype(jnp.int8)
    ground_truth_mask = (jax.random.uniform(k4, (B, 1, H, W)) > 0.5).astype(jnp.int8)

    loss, ce, iou = saliency_aware_loss(actual_lbl, predicted_lbl, salient_area,
                                        ground_truth_mask, weight_loss)
    loss = jax.block_until_ready(loss)

    ref_loss, ref_ce, ref_iou = _reference(actual_lbl, predicted_lbl, salient_area,
                                           ground_truth_mask, weight_loss)
    assert jnp.allclose(ce, ref_ce, atol=1e-5, rtol=1e-5), (ce, ref_ce)
    assert jnp.allclose(iou, ref_iou, atol=1e-5, rtol=1e-5), (iou, ref_iou)
    assert jnp.allclose(loss, ref_loss, atol=1e-5, rtol=1e-5), (loss, ref_loss)

    print("KERNEL_OK")
</pallas_src>

<mosaic_0001>
module attributes {stable_mosaic.version = 11 : i64} {
  func.func @kernel(%arg0: i32, %arg1: memref<1x1xf32, #tpu.memory_space<smem>>, %arg2: memref<8x4xf32, #tpu.memory_space<vmem>>, %arg3: memref<8x1xi32, #tpu.memory_space<vmem>>, %arg4: memref<8x128xi8, #tpu.memory_space<vmem>>, %arg5: memref<8x128xi8, #tpu.memory_space<vmem>>, %arg6: memref<1x1xf32, #tpu.memory_space<smem>>, %arg7: memref<1x1xf32, #tpu.memory_space<smem>>, %arg8: memref<1x1xf32, #tpu.memory_space<smem>>, %arg9: memref<8x128xf32, #tpu.memory_space<vmem>>, %arg10: memref<8x128xf32, #tpu.memory_space<vmem>>, %arg11: memref<1xf32, #tpu.memory_space<smem>>) attributes {dimension_semantics = [#tpu.dimension_semantics<arbitrary>], iteration_bounds = array<i64: 1>, scalar_prefetch = 0 : i64, scratch_operands = 3 : i64, tpu.core_type = #tpu.core_type<tc>, window_params = [{transform_indices = @transform_0, window_bounds = array<i64: 1, 1>}, {pipeline_mode = #tpu.pipeline_mode<synchronous>, transform_indices = @transform_1, window_bounds = array<i64: 8, 4>}, {pipeline_mode = #tpu.pipeline_mode<synchronous>, transform_indices = @transform_2, window_bounds = array<i64: 8, 1>}, {transform_indices = @transform_3, window_bounds = array<i64: 8, 128>}, {transform_indices = @transform_4, window_bounds = array<i64: 8, 128>}, {transform_indices = @transform_5, window_bounds = array<i64: 1, 1>}, {transform_indices = @transform_6, window_bounds = array<i64: 1, 1>}, {transform_indices = @transform_7, window_bounds = array<i64: 1, 1>}]} {
    %c0_i32 = arith.constant 0 : i32
    %0 = arith.cmpi eq, %arg0, %c0_i32 : i32
    %1 = arith.extui %0 : i1 to i32
    %c0_i32_0 = arith.constant 0 : i32
    %2 = arith.cmpi ne, %1, %c0_i32_0 : i32
    scf.if %2 {
      %cst_15 = arith.constant 0.000000e+00 : f32
      %21 = vector.broadcast %cst_15 : f32 to vector<8x128xf32>
      %c0_16 = arith.constant 0 : index
      %c0_17 = arith.constant 0 : index
      %22 = vector.load %arg9[%c0_16, %c0_17] : memref<8x128xf32, #tpu.memory_space<vmem>>, vector<8x128xf32>
      tpu.vector_store %arg9[%c0_16, %c0_17], %21 {strides = array<i32>} : memref<8x128xf32, #tpu.memory_space<vmem>>, vector<8x128xf32>,
      %cst_18 = arith.constant 0.000000e+00 : f32
      %23 = vector.broadcast %cst_18 : f32 to vector<8x128xf32>
      %c0_19 = arith.constant 0 : index
      %c0_20 = arith.constant 0 : index
      %24 = vector.load %arg10[%c0_19, %c0_20] : memref<8x128xf32, #tpu.memory_space<vmem>>, vector<8x128xf32>
      tpu.vector_store %arg10[%c0_19, %c0_20], %23 {strides = array<i32>} : memref<8x128xf32, #tpu.memory_space<vmem>>, vector<8x128xf32>,
      %c0_21 = arith.constant 0 : index
      %c0_22 = arith.constant 0 : index
      %25 = vector.load %arg2[%c0_21, %c0_22] : memref<8x4xf32, #tpu.memory_space<vmem>>, vector<8x4xf32>
      %c0_23 = arith.constant 0 : index
      %c0_24 = arith.constant 0 : index
      %26 = vector.load %arg3[%c0_23, %c0_24] : memref<8x1xi32, #tpu.memory_space<vmem>>, vector<8x1xi32>
      %27 = tpu.iota {dimensions = array<i32: 1>} : vector<8x4xi32>
      %28 = vector.broadcast %26 : vector<8x1xi32> to vector<8x4xi32>
      %29 = arith.cmpi eq, %27, %28 : vector<8x4xi32>
      %cst_25 = arith.constant 0.000000e+00 : f32
      %30 = vector.broadcast %cst_25 : f32 to vector<8x4xf32>
      %31 = arith.select %29, %25, %30 : vector<8x4xi1>, vector<8x4xf32>
      %cst_26 = arith.constant dense<0.000000e+00> : vector<8xf32>
      %32 = vector.multi_reduction <add>, %31, %cst_26 [1] : vector<8x4xf32> to vector<8xf32>
      %33 = vector.shape_cast %32 : vector<8xf32> to vector<8x1xf32>
      %cst_27 = arith.constant dense<0xFF800000> : vector<8xf32>
      %34 = vector.multi_reduction <maximumf>, %25, %cst_27 [1] : vector<8x4xf32> to vector<8xf32>
      %35 = vector.shape_cast %34 : vector<8xf32> to vector<8x1xf32>
      %36 = vector.broadcast %35 : vector<8x1xf32> to vector<8x4xf32>
      %37 = arith.subf %25, %36 : vector<8x4xf32>
      %38 = math.exp %37 : vector<8x4xf32>
      %cst_28 = arith.constant dense<0.000000e+00> : vector<8xf32>
      %39 = vector.multi_reduction <add>, %38, %cst_28 [1] : vector<8x4xf32> to vector<8xf32>
      %40 = vector.shape_cast %39 : vector<8xf32> to vector<8x1xf32>
      %41 = math.log %40 : vector<8x1xf32>
      %42 = arith.addf %35, %41 : vector<8x1xf32>
      %43 = arith.subf %42, %33 : vector<8x1xf32>
      %44 = vector.shape_cast %43 : vector<8x1xf32> to vector<1x8x1xf32>
      %cst_29 = arith.constant dense<0.000000e+00> : vector<1xf32>
      %45 = vector.multi_reduction <add>, %44, %cst_29 [1, 2] : vector<1x8x1xf32> to vector<1xf32>
      %46 = vector.shape_cast %45 : vector<1xf32> to vector<1x1x1xf32>
      %47 = vector.extract %46[0, 0, 0] : f32 from vector<1x1x1xf32>
      %cst_30 = arith.constant 8.000000e+00 : f32
      %48 = arith.divf %47, %cst_30 : f32
      %c0_31 = arith.constant 0 : index
      %49 = memref.load %arg11[%c0_31] : memref<1xf32, #tpu.memory_space<smem>>
      memref.store %48, %arg11[%c0_31] : memref<1xf32, #tpu.memory_space<smem>>
    } else {
    }
    %c0 = arith.constant 0 : index
    %c0_1 = arith.constant 0 : index
    %3 = vector.load %arg4[%c0, %c0_1] : memref<8x128xi8, #tpu.memory_space<vmem>>, vector<8x128xi8>
    %4 = arith.sitofp %3 : vector<8x128xi8> to vector<8x128xf32>
    %c0_2 = arith.constant 0 : index
    %c0_3 = arith.constant 0 : index
    %5 = vector.load %arg5[%c0_2, %c0_3] : memref<8x128xi8, #tpu.memory_space<vmem>>, vector<8x128xi8>
    %6 = arith.sitofp %5 : vector<8x128xi8> to vector<8x128xf32>
    %7 = arith.mulf %4, %6 : vector<8x128xf32>
    %c0_4 = arith.constant 0 : index
    %c0_5 = arith.constant 0 : index
    %8 = vector.load %arg9[%c0_4, %c0_5] : memref<8x128xf32, #tpu.memory_space<vmem>>, vector<8x128xf32>
    %9 = vector.shape_cast %7 : vector<8x128xf32> to vector<1x8x128xf32>
    %cst = arith.constant dense<0.000000e+00> : vector<8x128xf32>
    %10 = vector.multi_reduction <add>, %9, %cst [0] : vector<1x8x128xf32> to vector<8x128xf32>
    %11 = arith.addf %8, %10 : vector<8x128xf32>
    %c0_6 = arith.constant 0 : index
    %c0_7 = arith.constant 0 : index
    %12 = vector.load %arg9[%c0_6, %c0_7] : memref<8x128xf32, #tpu.memory_space<vmem>>, vector<8x128xf32>
    tpu.vector_store %arg9[%c0_6, %c0_7], %11 {strides = array<i32>} : memref<8x128xf32, #tpu.memory_space<vmem>>, vector<8x128xf32>,
    %c0_8 = arith.constant 0 : index
    %c0_9 = arith.constant 0 : index
    %13 = vector.load %arg10[%c0_8, %c0_9] : memref<8x128xf32, #tpu.memory_space<vmem>>, vector<8x128xf32>
    %14 = vector.shape_cast %4 : vector<8x128xf32> to vector<1x8x128xf32>
    %cst_10 = arith.constant dense<0.000000e+00> : vector<8x128xf32>
    %15 = vector.multi_reduction <add>, %14, %cst_10 [0] : vector<1x8x128xf32> to vector<8x128xf32>
    %16 = arith.addf %13, %15 : vector<8x128xf32>
    %c0_11 = arith.constant 0 : index
    %c0_12 = arith.constant 0 : index
    %17 = vector.load %arg10[%c0_11, %c0_12] : memref<8x128xf32, #tpu.memory_space<vmem>>, vector<8x128xf32>
    tpu.vector_store %arg10[%c0_11, %c0_12], %16 {strides = array<i32>} : memref<8x128xf32, #tpu.memory_space<vmem>>, vector<8x128xf32>,
    %c0_i32_13 = arith.constant 0 : i32
    %18 = arith.cmpi eq, %arg0, %c0_i32_13 : i32
    %19 = arith.extui %18 : i1 to i32
    %c0_i32_14 = arith.constant 0 : i32
    %20 = arith.cmpi ne, %19, %c0_i32_14 : i32
    scf.if %20 {
      %c0_15 = arith.constant 0 : index
      %c0_16 = arith.constant 0 : index
      %21 = vector.load %arg9[%c0_15, %c0_16] : memref<8x128xf32, #tpu.memory_space<vmem>>, vector<8x128xf32>
      %22 = vector.shape_cast %21 : vector<8x128xf32> to vector<1x8x128xf32>
      %cst_17 = arith.constant dense<0.000000e+00> : vector<1xf32>
      %23 = vector.multi_reduction <add>, %22, %cst_17 [1, 2] : vector<1x8x128xf32> to vector<1xf32>
      %24 = vector.shape_cast %23 : vector<1xf32> to vector<1x1x1xf32>
      %25 = vector.extract %24[0, 0, 0] : f32 from vector<1x1x1xf32>
      %c0_18 = arith.constant 0 : index
      %c0_19 = arith.constant 0 : index
      %26 = vector.load %arg10[%c0_18, %c0_19] : memref<8x128xf32, #tpu.memory_space<vmem>>, vector<8x128xf32>
      %27 = vector.shape_cast %26 : vector<8x128xf32> to vector<1x8x128xf32>
      %cst_20 = arith.constant dense<0.000000e+00> : vector<1xf32>
      %28 = vector.multi_reduction <add>, %27, %cst_20 [1, 2] : vector<1x8x128xf32> to vector<1xf32>
      %29 = vector.shape_cast %28 : vector<1xf32> to vector<1x1x1xf32>
      %30 = vector.extract %29[0, 0, 0] : f32 from vector<1x1x1xf32>
      %cst_21 = arith.constant 9.99999997E-7 : f32
      %31 = arith.addf %30, %cst_21 : f32
      %32 = arith.divf %25, %31 : f32
      %c0_22 = arith.constant 0 : index
      %33 = memref.load %arg11[%c0_22] : memref<1xf32, #tpu.memory_space<smem>>
      %c0_23 = arith.constant 0 : index
      %c0_24 = arith.constant 0 : index
      %34 = memref.load %arg1[%c0_23, %c0_24] : memref<1x1xf32, #tpu.memory_space<smem>>
      %c0_25 = arith.constant 0 : index
      %c0_26 = arith.constant 0 : index
      %35 = memref.load %arg7[%c0_25, %c0_26] : memref<1x1xf32, #tpu.memory_space<smem>>
      memref.store %33, %arg7[%c0_25, %c0_26] : memref<1x1xf32, #tpu.memory_space<smem>>
      %c0_27 = arith.constant 0 : index
      %c0_28 = arith.constant 0 : index
      %36 = memref.load %arg8[%c0_27, %c0_28] : memref<1x1xf32, #tpu.memory_space<smem>>
      memref.store %32, %arg8[%c0_27, %c0_28] : memref<1x1xf32, #tpu.memory_space<smem>>
      %37 = arith.mulf %34, %33 : f32
      %cst_29 = arith.constant 1.000000e+00 : f32
      %38 = arith.subf %cst_29, %34 : f32
      %39 = arith.mulf %38, %32 : f32
      %40 = arith.subf %37, %39 : f32
      %c0_30 = arith.constant 0 : index
      %c0_31 = arith.constant 0 : index
      %41 = memref.load %arg6[%c0_30, %c0_31] : memref<1x1xf32, #tpu.memory_space<smem>>
      memref.store %40, %arg6[%c0_30, %c0_31] : memref<1x1xf32, #tpu.memory_space<smem>>
    } else {
    }
    return
  }
  func.func @transform_0(%arg0: i32) -> (i32, i32) {
    %c0_i32 = arith.constant 0 : i32
    %c0_i32_0 = arith.constant 0 : i32
    %c0_i32_1 = arith.constant 0 : i32
    return %c0_i32, %c0_i32_0 : i32, i32
  }
  func.func @transform_1(%arg0: i32) -> (i32, i32) {
    %c0_i32 = arith.constant 0 : i32
    %c0_i32_0 = arith.constant 0 : i32
    %c0_i32_1 = arith.constant 0 : i32
    return %c0_i32, %c0_i32_0 : i32, i32
  }
  func.func @transform_2(%arg0: i32) -> (i32, i32) {
    %c0_i32 = arith.constant 0 : i32
    %c0_i32_0 = arith.constant 0 : i32
    %c0_i32_1 = arith.constant 0 : i32
    return %c0_i32, %c0_i32_0 : i32, i32
  }
  func.func @transform_3(%arg0: i32) -> (i32, i32) {
    %c0_i32 = arith.constant 0 : i32
    %c0_i32_0 = arith.constant 0 : i32
    return %arg0, %c0_i32 : i32, i32
  }
  func.func @transform_4(%arg0: i32) -> (i32, i32) {
    %c0_i32 = arith.constant 0 : i32
    %c0_i32_0 = arith.constant 0 : i32
    return %arg0, %c0_i32 : i32, i32
  }
  func.func @transform_5(%arg0: i32) -> (i32, i32) {
    %c0_i32 = arith.constant 0 : i32
    %c0_i32_0 = arith.constant 0 : i32
    %c0_i32_1 = arith.constant 0 : i32
    return %c0_i32, %c0_i32_0 : i32, i32
  }
  func.func @transform_6(%arg0: i32) -> (i32, i32) {
    %c0_i32 = arith.constant 0 : i32
    %c0_i32_0 = arith.constant 0 : i32
    %c0_i32_1 = arith.constant 0 : i32
    return %c0_i32, %c0_i32_0 : i32, i32
  }
  func.func @transform_7(%arg0: i32) -> (i32, i32) {
    %c0_i32 = arith.constant 0 : i32
    %c0_i32_0 = arith.constant 0 : i32
    %c0_i32_1 = arith.constant 0 : i32
    return %c0_i32, %c0_i32_0 : i32, i32
  }
}

</mosaic_0001>

<llo_original>
// kernel: tpu_custom_call.1
$region0: #{tpu_custom_call.1}
  #allocation0 [shape = 'u32[]', space=smem, size = 0x4, offset = 0x4, fixed_abs, tag = 'smem constant byte address 0x4 - core index']
  #allocation1 [shape = 'u32[144,128]{1,0:T(1,128)}', space=vmem, size = 0x12000, scoped, tag = 'internal scratch']
  #allocation2 [shape = 'f32[8,128]{1,0:T(8,128)}', space=vmem, size = 0x1000, scoped, tag = 'scratch operand']
  #allocation3 [shape = 'f32[8,128]{1,0:T(8,128)}', space=vmem, size = 0x1000, scoped, tag = 'scratch operand']
  #allocation4 [shape = 'f32[1]{0:T(128)}', space=smem, size = 0x200, scoped, tag = 'scratch operand']
  #allocation5 [shape = 'f32[1,1]{1,0:T(1,128)S(6)}', space=smem, size = 0x200, scoped, tag = 'scoped memory for tpu_custom_call.1']
  %s0 = inlined_call_operand.<no memory space> [shape: f32[1,1], index: 0, kind: input, shape index: {}]
  %s1 = inlined_call_operand.vmem [shape: f32[8,4], index: 1, kind: input, shape index: {}]
  %s2 = inlined_call_operand.vmem [shape: s32[8,1], index: 2, kind: input, shape index: {}]
  %s3 = inlined_call_operand.vmem [shape: s8[8,128], index: 3, kind: input, shape index: {}]
  %s4 = inlined_call_operand.vmem [shape: s8[8,128], index: 4, kind: input, shape index: {}]
  %s5 = inlined_call_operand.hbm [shape: f32[1,1], index: 5, kind: output, shape index: {0}]
  %s6 = inlined_call_operand.hbm [shape: f32[1,1], index: 6, kind: output, shape index: {1}]
  %s7 = inlined_call_operand.hbm [shape: f32[1,1], index: 7, kind: output, shape index: {2}]
  %8 = xla_tuple %s5, %s6, %s7
  %s9 = sld [smem:[#allocation0]]
  $region54: #{tpu_custom_call.1} parent=0
    _
  %s11 = ssub.s32 1, %s9
  %s12 = scalar_select 0, %s11, %s9
  %13 = sst [smem:[#allocation5]] %s0
  $region1: #{tpu_custom_call.1} parent=0
    #allocation6 [shape = 'u8[512]{0}', space=smem, size = 0x200, scoped, tag = 'output window, operand 0, single buffered']
    #allocation7 [shape = 's32[1]{0}', space=sflag, size = 0x4, scoped, tag = 'scoped memory for tpu_custom_call.1']
    #allocation8 [shape = 'u8[512]{0}', space=smem, size = 0x200, scoped, tag = 'output window, operand 1, single buffered']
    #allocation9 [shape = 's32[1]{0}', space=sflag, size = 0x4, scoped, tag = 'scoped memory for tpu_custom_call.1']
    #allocation10 [shape = 'u8[512]{0}', space=smem, size = 0x200, scoped, tag = 'output window, operand 2, single buffered']
    %14 = vsyncpa [#allocation7], 0
    %15 = vsyncpa [#allocation9], 0
    // Predicated region
    $region2: #{tpu_custom_call.1} parent=1 // pred_check
      _
    $region3: #{tpu_custom_call.1} parent=1 // pred_check_branch
      %17 = sbr.rel (0) target = $region5
    $region4: #{tpu_custom_call.1} parent=1 // pred_region
      _
    $region5: #{tpu_custom_call.1} parent=1 // pred_fallthru
      _
    // Predicated region
    $region6: #{tpu_custom_call.1} parent=1 // pred_check
      _
    $region7: #{tpu_custom_call.1} parent=1 // pred_check_branch
      %19 = sbr.rel (0) target = $region9
    $region8: #{tpu_custom_call.1} parent=1 // pred_region
      _
    $region9: #{tpu_custom_call.1} parent=1 // pred_fallthru
      _
    // Predicated region
    $region10: #{tpu_custom_call.1} parent=1 // pred_check
      _
    $region11: #{tpu_custom_call.1} parent=1 // pred_check_branch
      %21 = sbr.rel (0) target = $region13
    $region12: #{tpu_custom_call.1} parent=1 // pred_region
      _
    $region13: #{tpu_custom_call.1} parent=1 // pred_fallthru
      _
    // Predicated region
    $region14: #{tpu_custom_call.1} parent=1 // pred_check
      _
    $region15: #{tpu_custom_call.1} parent=1 // pred_check_branch
      %23 = sbr.rel (0) target = $region17
    $region16: #{tpu_custom_call.1} parent=1 // pred_region
      _
    $region17: #{tpu_custom_call.1} parent=1 // pred_fallthru
      _
    // Predicated region
    $region18: #{tpu_custom_call.1} parent=1 // pred_check
      _
    $region19: #{tpu_custom_call.1} parent=1 // pred_check_branch
      %25 = sbr.rel (0) target = $region21
    $region20: #{tpu_custom_call.1} parent=1 // pred_region
      _
    $region21: #{tpu_custom_call.1} parent=1 // pred_fallthru
      _
    %p26 = scmp.eq.s32.totalorder 0, 0
    // Predicated region
    $region22: #{tpu_custom_call.1} parent=1 // pred_check
      %p27 = pneg %p26
    $region23: #{tpu_custom_call.1} parent=1 // pred_check_branch
      %29 = sbr.rel (%p27) target = $region25
    $region24: #{tpu_custom_call.1} parent=1 // pred_region
      %30 = vst [vmem:[#allocation2] sm:$0xff] 0.0
      %31 = vst [vmem:[#allocation3] sm:$0xff] 0.0
      %v32 = vld [vmem:[%s1] sm:$0xff]
      %v33 = vld [vmem:[%s2] sm:$0xff]
      %v34 = vlaneseq
      %v35 = vand.u32 %v34, 127
      %36 = vset.pattern.permute.xlu0 0
      %37 = vperm.xlu0 %36, %v33
      %v38 = vpop.permute.xlu0 %37
      %vm39 = vcmp.eq.s32.totalorder %v35, %v38
      %v40 = vsel %vm39, %v32, 0.0
      %vm41 = vcmask 31744
      %v42 = vsel %vm41, %v40, 0.0
      %43 = vadd.xlane.f32.xlu0 %v42
      %v44 = vpop.xlane.xlu0 %43
      %v45 = vsel %vm41, %v32, -inf
      %46 = vmax.xlane.f32.xlu0 %v45
      %v47 = vpop.xlane.xlu0 %46
      %v48 = vsub.f32 %v32, %v47
      %v49 = vmul.f32 %v48, 1.442695
      %v50 = vpow.pop %v49
      %v51 = vsel %vm41, %v50, 0.0
      %52 = vadd.xlane.f32.xlu0 %v51
      %v53 = vpop.xlane.xlu0 %52
      %v54 = vlog2.pop %v53
      %v55 = vmul.f32 %v54, 0.6931472
      %v56 = vadd.f32 %v47, %v55
      %v57 = vsub.f32 %v56, %v44
      %vm58 = vcmask 7168
      %v59 = vsel %vm58, %v57, 0.0
      %60 = vadd.xlane.f32.xlu0 %v59
      %v61 = vpop.xlane.xlu0 %60
      %v62 = vrot.slane %v61, 4
      %v63 = vadd.f32 %v61, %v62
      %v64 = vrot.slane %v63, 2
      %v65 = vadd.f32 %v63, %v64
      %v66 = vrot.slane %v65, 1
      %v67 = vadd.f32 %v65, %v66
      %s68 = vtos %v67
      %v69 = vrcp.pop 8.0
      %s70 = vtos %v69
      %s71 = smul.f32 %s68, %s70
      %s72 = scalar_lea.smem [#allocation4], 0
      %73 = sst [smem:[%s72]] %s71
    $region25: #{tpu_custom_call.1} parent=1 // pred_fallthru
      _
    %v74 = vld [vmem:[%s3] sm:$0x3]
    %v75 = vunpack.c.0.s8 %v74
    %v76 = vcvt.s32.f32 %v75
    %v77 = vld [vmem:[%s4] sm:$0x3]
    %v78 = vunpack.c.0.s8 %v77
    %v79 = vcvt.s32.f32 %v78
    %v80 = vmul.f32 %v76, %v79
    %v81 = vld [vmem:[#allocation2] sm:$0xff]
    %v82 = vadd.f32 %v80, 0.0
    %v83 = vadd.f32 %v81, %v82
    %84 = vst [vmem:[#allocation2] sm:$0xff] %v83
    %v85 = vld [vmem:[#allocation3] sm:$0xff]
    %v86 = vadd.f32 %v76, 0.0
    %v87 = vadd.f32 %v85, %v86
    %88 = vst [vmem:[#allocation3] sm:$0xff] %v87
    // Predicated region
    $region26: #{tpu_custom_call.1} parent=1 // pred_check
      %p89 = pneg %p26
    $region27: #{tpu_custom_call.1} parent=1 // pred_check_branch
      %91 = sbr.rel (%p89) target = $region29
    $region28: #{tpu_custom_call.1} parent=1 // pred_region
      %v92 = vld [vmem:[#allocation2] sm:$0xff]
      %93 = vadd.xlane.f32.xlu0 %v92
      %v94 = vpop.xlane.xlu0 %93
      %v95 = vrot.slane %v94, 4
      %v96 = vadd.f32 %v94, %v95
      %v97 = vrot.slane %v96, 2
      %v98 = vadd.f32 %v96, %v97
      %v99 = vrot.slane %v98, 1
      %v100 = vadd.f32 %v98, %v99
      %s101 = vtos %v100
      %v102 = vld [vmem:[#allocation3] sm:$0xff]
      %103 = vadd.xlane.f32.xlu0 %v102
      %v104 = vpop.xlane.xlu0 %103
      %v105 = vrot.slane %v104, 4
      %v106 = vadd.f32 %v104, %v105
      %v107 = vrot.slane %v106, 2
      %v108 = vadd.f32 %v106, %v107
      %v109 = vrot.slane %v108, 1
      %v110 = vadd.f32 %v108, %v109
      %s111 = vtos %v110
      %s112 = sadd.f32 %s111, 1e-06
      %v113 = vstv %s112
      %v114 = vrcp.pop %v113
      %s115 = vtos %v114
      %s116 = smul.f32 %s101, %s115
      %s117 = sld [smem:[#allocation4]]
      %s118 = sld [smem:[#allocation5]]
      %s119 = scalar_lea.smem [#allocation8], 0
      %120 = sst [smem:[%s119]] %s117
      %s121 = scalar_lea.smem [#allocation10], 0
      %122 = sst [smem:[%s121]] %s116
      %s123 = smul.f32 %s118, %s117
      %s124 = ssub.f32 1.0, %s118
      %s125 = smul.f32 %s124, %s116
      %s126 = ssub.f32 %s123, %s125
      %s127 = scalar_lea.smem [#allocation6], 0
      %128 = sst [smem:[%s127]] %s126
    $region29: #{tpu_custom_call.1} parent=1 // pred_fallthru
      _
    // Predicated region
    $region30: #{tpu_custom_call.1} parent=1 // pred_check
      _
    $region31: #{tpu_custom_call.1} parent=1 // pred_check_branch
      %130 = sbr.rel (0) target = $region33
    $region32: #{tpu_custom_call.1} parent=1 // pred_region
      %s132 = ssub.s32 16, 16
      %133 = vsyncadd [#allocation7], %s132
      %136 = dma.smem_to_hbm [#allocation6], 16, %s5, [#allocation7]
    $region33: #{tpu_custom_call.1} parent=1 // pred_fallthru
      _
    // Predicated region
    $region34: #{tpu_custom_call.1} parent=1 // pred_check
      _
    $region35: #{tpu_custom_call.1} parent=1 // pred_check_branch
      %138 = sbr.rel (0) target = $region37
    $region36: #{tpu_custom_call.1} parent=1 // pred_region
      %s140 = ssub.s32 16, 16
      %141 = vsyncadd [#allocation9], %s140
      %144 = dma.smem_to_hbm [#allocation8], 16, %s6, [#allocation9]
    $region37: #{tpu_custom_call.1} parent=1 // pred_fallthru
      _
    // Predicated region
    $region38: #{tpu_custom_call.1} parent=1 // pred_check
      _
    $region39: #{tpu_custom_call.1} parent=1 // pred_check_branch
      %146 = sbr.rel (0) target = $region41
    $region40: #{tpu_custom_call.1} parent=1 // pred_region
      %s148 = ssub.s32 16, 16
      %149 = vsyncadd [#allocation9], %s148
      %152 = dma.smem_to_hbm [#allocation10], 16, %s7, [#allocation9]
    $region41: #{tpu_custom_call.1} parent=1 // pred_fallthru
      _
    // Predicated region
    $region42: #{tpu_custom_call.1} parent=1 // pred_check
      _
    $region43: #{tpu_custom_call.1} parent=1 // pred_check_branch
      %154 = sbr.rel (0) target = $region45
    $region44: #{tpu_custom_call.1} parent=1 // pred_region
      %155 = dma.done [#allocation7], 16
    $region45: #{tpu_custom_call.1} parent=1 // pred_fallthru
      _
    // Predicated region
    $region46: #{tpu_custom_call.1} parent=1 // pred_check
      _
    $region47: #{tpu_custom_call.1} parent=1 // pred_check_branch
      %157 = sbr.rel (0) target = $region49
    $region48: #{tpu_custom_call.1} parent=1 // pred_region
      %158 = dma.done [#allocation9], 16
    $region49: #{tpu_custom_call.1} parent=1 // pred_fallthru
      _
    // Predicated region
    $region50: #{tpu_custom_call.1} parent=1 // pred_check
      _
    $region51: #{tpu_custom_call.1} parent=1 // pred_check_branch
      %160 = sbr.rel (0) target = $region53
    $region52: #{tpu_custom_call.1} parent=1 // pred_region
      %161 = dma.done [#allocation9], 16
    $region53: #{tpu_custom_call.1} parent=1 // pred_fallthru
      _
    %162 = sfence
    %163 = vsyncpa [#allocation7], 1
    %164 = vsyncpa [#allocation9], 1

</llo_original>
